<compile_context>
chip_gen: v5e
topology: v5e:2x2
jax: 0.10.0
libtpu: 0.0.40
codegen_flags: <defaults>
</compile_context>

<pallas_src>
import functools

import jax
import jax.numpy as jnp
from jax.experimental import pallas as pl
from jax.experimental.pallas import tpu as pltpu


_HIDDEN = 64                  # hidden width of each of g / h (PyTorch default)
_FUSED_HIDDEN = 3 * _HIDDEN   # g(s) | h(s) | h(s') stacked -> 192-wide hidden
_HEAD_ROWS = 8                # final projection rows, padded to a full sublane


def _round_up(x, m):
    return (x + m - 1) // m * m


def _airl_discrim_kernel(
    s_ref,        # [D, TB]  states^T tile (bf16)
    ns_ref,       # [D, TB]  next_states^T tile (bf16)
    dones_ref,    # [1, TB]  (f32)
    log_pis_ref,  # [1, TB]  (f32)
    w1s_ref, w1n_ref, b1_ref, w2_ref, b2_ref, w3_ref, b3_ref,  # packed params
    out_ref,      # [1, TB]  (f32)
    *, gamma,
):
    # Layer 1: split W1 into the piece acting on states and the piece acting
    # on next_states (same total MXU work as the stacked [192, 2D] form, but
    # avoids an in-kernel concat of the two input tiles).
    h1 = jnp.maximum(
        jnp.dot(w1s_ref[...], s_ref[...], preferred_element_type=jnp.float32)
        + jnp.dot(w1n_ref[...], ns_ref[...], preferred_element_type=jnp.float32)
        + b1_ref[...], 0.0)
    h2 = jnp.maximum(
        jnp.dot(w2_ref[...], h1.astype(jnp.bfloat16),
                preferred_element_type=jnp.float32)
        + b2_ref[...], 0.0)
    z = (jnp.dot(w3_ref[...], h2.astype(jnp.bfloat16),
                 preferred_element_type=jnp.float32)
         + b3_ref[...])                      # [8, TB], f32

    # W3 already folds the g(s) - h(s) subtraction:
    #   z[0] = g(s) - h(s),   z[1] = h(s')
    f = z[0:1, :] + gamma * (1.0 - dones_ref[...]) * z[1:2, :]

    # forward: exp(f) / (exp(f) + exp(log_pi)) == sigmoid(f - log_pi)
    out_ref[...] = 1.0 / (1.0 + jnp.exp(log_pis_ref[...] - f))


def _pack_params(params, state_dim):
    """Pack g/h MLP params into one block-diagonal 192-wide matmul chain.

    Matmul operands are returned in bf16 (MXU-native); biases stay f32 since
    they are added after the f32 accumulation.
    """
    (gw1, gb1, gw2, gb2, gw3, gb3,
     hw1, hb1, hw2, hb2, hw3, hb3) = params
    D, H, HP = state_dim, _HIDDEN, _FUSED_HIDDEN
    f32, bf16 = jnp.float32, jnp.bfloat16

    # Layer 1: w1s acts on states (g rows 0:64, h rows 64:128),
    #          w1n acts on next_states (h rows 128:192).
    w1s = jnp.zeros((HP, D), f32)
    w1s = w1s.at[0:H, :].set(gw1.T)
    w1s = w1s.at[H:2 * H, :].set(hw1.T)
    w1n = jnp.zeros((HP, D), f32)
    w1n = w1n.at[2 * H:3 * H, :].set(hw1.T)
    b1 = jnp.concatenate([gb1, hb1, hb1], axis=1).T          # [192, 1]

    # Layer 2: block-diagonal g2 / h2 / h2.
    w2 = jnp.zeros((HP, HP), f32)
    w2 = w2.at[0:H, 0:H].set(gw2.T)
    w2 = w2.at[H:2 * H, H:2 * H].set(hw2.T)
    w2 = w2.at[2 * H:3 * H, 2 * H:3 * H].set(hw2.T)
    b2 = jnp.concatenate([gb2, hb2, hb2], axis=1).T          # [192, 1]

    # Layer 3 with the g(s) - h(s) subtraction folded in:
    #   row 0 = [g3^T | -h3^T | 0], bias gb3 - hb3  -> z0 = g(s) - h(s)
    #   row 1 = [0    | 0     | h3^T], bias hb3     -> z1 = h(s')
    w3 = jnp.zeros((_HEAD_ROWS, HP), f32)
    w3 = w3.at[0:1, 0:H].set(gw3.T)
    w3 = w3.at[0:1, H:2 * H].set(-hw3.T)
    w3 = w3.at[1:2, 2 * H:3 * H].set(hw3.T)
    b3 = jnp.zeros((_HEAD_ROWS, 1), f32)
    b3 = b3.at[0, 0].set(gb3[0, 0] - hb3[0, 0])
    b3 = b3.at[1, 0].set(hb3[0, 0])

    return (w1s.astype(bf16), w1n.astype(bf16), b1,
            w2.astype(bf16), b2, w3.astype(bf16), b3)


def _choose_tile(batch, block_b):
    """Pick a lane-dense (multiple-of-128) batch tile.

    Overhead-bound kernel -> keep grid steps few and large, but make sure
    there are >= 2 grid steps whenever the batch is big enough to split, so
    v7x's two TensorCores both get work via the "parallel" batch axis.
    """
    b128 = _round_up(max(batch, 1), 128)
    tb = min(max(_round_up(block_b, 128), 128), b128)
    if b128 >= 256 and pl.cdiv(batch, tb) < 2:
        tb = _round_up(pl.cdiv(batch, 2), 128)
    return max(tb, 128)


def airl_discrim_forward(states, dones, log_pis, next_states, params, gamma,
                         block_b=2048):
    """AIRLDiscrim.forward.  states/next_states: [B, D]; dones/log_pis: [B].

    Returns [B, 1] (same as the PyTorch module).
    block_b: requested batch-tile size (lanes per grid step), rounded to a
    multiple of 128.
    """
    B, D = states.shape

    # Batch on the lane axis + bf16 MXU operands.  One fused transpose+cast
    # per activation array; no zero-fill / scatter repack, no batch padding
    # (Pallas masks the ragged last tile; only out[:, :B] is consumed).
    s_t = states.T.astype(jnp.bfloat16)          # [D, B]
    ns_t = next_states.T.astype(jnp.bfloat16)    # [D, B]
    dones2 = dones.reshape(1, B).astype(jnp.float32)
    log_pis2 = log_pis.reshape(1, B).astype(jnp.float32)

    tb = _choose_tile(B, block_b)
    n_tiles = pl.cdiv(B, tb)

    packed = _pack_params(params, D)
    w_bytes = sum(int(p.size) * p.dtype.itemsize for p in packed)

    row_spec = pl.BlockSpec((1, tb), lambda i: (0, i))
    in_specs = [pl.BlockSpec((D, tb), lambda i: (0, i)),   # states^T
                pl.BlockSpec((D, tb), lambda i: (0, i)),   # next_states^T
                row_spec,                                  # dones
                row_spec]                                  # log_pis
    # Weights: full block, constant index -> resident across all grid steps.
    # (Double-buffering these costs <200 KiB total, so a Buffered(1) hint is
    # not worth the added lowering risk.)
    in_specs += [pl.BlockSpec(p.shape, lambda i: (0, 0)) for p in packed]

    total_cols = n_tiles * tb
    flops = 2 * total_cols * (_FUSED_HIDDEN * 2 * D
                              + _FUSED_HIDDEN * _FUSED_HIDDEN
                              + _HEAD_ROWS * _FUSED_HIDDEN)
    bytes_accessed = (2 * D * B * 2      # states + next_states (bf16)
                      + 2 * B * 4        # dones + log_pis (f32)
                      + B * 4            # output (f32)
                      + w_bytes)

    out = pl.pallas_call(
        functools.partial(_airl_discrim_kernel, gamma=float(gamma)),
        out_shape=jax.ShapeDtypeStruct((1, B), jnp.float32),
        grid=(n_tiles,),
        in_specs=in_specs,
        out_specs=pl.BlockSpec((1, tb), lambda i: (0, i)),
        compiler_params=pltpu.CompilerParams(
            dimension_semantics=("parallel",)),
        cost_estimate=pl.CostEstimate(
            flops=flops, transcendentals=total_cols,
            bytes_accessed=bytes_accessed),
    )(s_t, ns_t, dones2, log_pis2, *packed)

    return out.reshape(B, 1)


def airl_calculate_reward(states, dones, log_pis, next_states, params, gamma):
    """AIRLDiscrim.calculate_reward (thin pure-JAX wrapper over the kernel)."""
    logits = airl_discrim_forward(states, dones, log_pis, next_states, params,
                                  gamma)
    return jnp.log(logits + 0.001) - jnp.log(1.0 - logits + 0.001)


def init_params(key, state_dim, hidden=(64, 64)):
    """torch.nn.Linear-like init (uniform +/- 1/sqrt(fan_in)).

    Weights stored [in, out]; biases [1, out].
    """
    dims = [state_dim, hidden[0], hidden[1], 1]
    params = []
    for _net in range(2):  # g then h
        for layer in range(3):
            fan_in, fan_out = dims[layer], dims[layer + 1]
            key, kw, kb = jax.random.split(key, 3)
            bound = 1.0 / jnp.sqrt(jnp.float32(fan_in))
            w = jax.random.uniform(kw, (fan_in, fan_out), jnp.float32,
                                   -bound, bound)
            b = jax.random.uniform(kb, (1, fan_out), jnp.float32,
                                   -bound, bound)
            params.append(w)
            params.append(b)
    return tuple(params)


def _reference_forward(states, dones, log_pis, next_states, params, gamma):
    """Pure-JAX f32 reference matching the PyTorch forward."""
    (gw1, gb1, gw2, gb2, gw3, gb3,
     hw1, hb1, hw2, hb2, hw3, hb3) = params

    def mlp(x, w1, b1, w2, b2, w3, b3):
        h1 = jnp.maximum(x @ w1 + b1, 0.0)
        h2 = jnp.maximum(h1 @ w2 + b2, 0.0)
        return h2 @ w3 + b3

    rs = mlp(states, gw1, gb1, gw2, gb2, gw3, gb3)
    vs = mlp(states, hw1, hb1, hw2, hb2, hw3, hb3)
    nvs = mlp(next_states, hw1, hb1, hw2, hb2, hw3, hb3)
    f = rs + gamma * (1.0 - dones[:, None]) * nvs - vs
    exp_f = jnp.exp(f)
    return exp_f / (exp_f + jnp.exp(log_pis[:, None]))


if __name__ == "__main__":
    key = jax.random.PRNGKey(0)
    GAMMA = 0.99
    STATE_DIM = 8
    # bf16 matmul operands -> looser tolerance than the f32 reference.
    ATOL = RTOL = 2e-2

    kp, ks, kn, kd, kl = jax.random.split(key, 5)
    params = init_params(kp, STATE_DIM)

    # --- small test (single tile, B < 128) ---
    B = 8
    states = jax.random.normal(ks, (B, STATE_DIM), jnp.float32)
    next_states = jax.random.normal(kn, (B, STATE_DIM), jnp.float32)
    dones = (jax.random.uniform(kd, (B,)) < 0.3).astype(jnp.float32)
    log_pis = -jnp.abs(jax.random.normal(kl, (B,), jnp.float32))

    out = jax.block_until_ready(
        airl_discrim_forward(states, dones, log_pis, next_states, params,
                             GAMMA))
    ref = _reference_forward(states, dones, log_pis, next_states, params,
                             GAMMA)
    assert out.shape == (B, 1)
    assert jnp.allclose(out, ref, atol=ATOL, rtol=RTOL), float(
        jnp.max(jnp.abs(out - ref)))

    # --- multi-tile test: >=2 parallel grid steps + ragged last tile ---
    B2 = 300
    k0, k1, k2, k3 = jax.random.split(key, 4)
    s2 = jax.random.normal(k0, (B2, STATE_DIM), jnp.float32)
    ns2 = jax.random.normal(k1, (B2, STATE_DIM), jnp.float32)
    d2 = (jax.random.uniform(k2, (B2,)) < 0.3).astype(jnp.float32)
    lp2 = -jnp.abs(jax.random.normal(k3, (B2,), jnp.float32))

    out2 = jax.block_until_ready(
        airl_discrim_forward(s2, d2, lp2, ns2, params, GAMMA))
    ref2 = _reference_forward(s2, d2, lp2, ns2, params, GAMMA)
    assert out2.shape == (B2, 1)
    assert jnp.allclose(out2, ref2, atol=ATOL, rtol=RTOL), float(
        jnp.max(jnp.abs(out2 - ref2)))

    # --- forced small tile: 3 grid steps, exercises the tiling path harder ---
    out3 = jax.block_until_ready(
        airl_discrim_forward(s2, d2, lp2, ns2, params, GAMMA, block_b=128))
    assert jnp.allclose(out3, ref2, atol=ATOL, rtol=RTOL), float(
        jnp.max(jnp.abs(out3 - ref2)))

    # --- calculate_reward path ---
    rew = jax.block_until_ready(
        airl_calculate_reward(s2, d2, lp2, ns2, params, GAMMA))
    rew_ref = jnp.log(ref2 + 0.001) - jnp.log(1.0 - ref2 + 0.001)
    assert jnp.allclose(rew, rew_ref, atol=5e-2, rtol=5e-2), float(
        jnp.max(jnp.abs(rew - rew_ref)))

    print("KERNEL_OK")
</pallas_src>

<mosaic_0001>
module attributes {stable_mosaic.version = 11 : i64} {
  func.func @_airl_discrim_kernel(%arg0: i32, %arg1: memref<8x128xbf16, #tpu.memory_space<vmem>>, %arg2: memref<8x128xbf16, #tpu.memory_space<vmem>>, %arg3: memref<1x128xf32, #tpu.memory_space<vmem>>, %arg4: memref<1x128xf32, #tpu.memory_space<vmem>>, %arg5: memref<192x8xbf16, #tpu.memory_space<vmem>>, %arg6: memref<192x8xbf16, #tpu.memory_space<vmem>>, %arg7: memref<192x1xf32, #tpu.memory_space<vmem>>, %arg8: memref<192x192xbf16, #tpu.memory_space<vmem>>, %arg9: memref<192x1xf32, #tpu.memory_space<vmem>>, %arg10: memref<8x192xbf16, #tpu.memory_space<vmem>>, %arg11: memref<8x1xf32, #tpu.memory_space<vmem>>, %arg12: memref<1x128xf32, #tpu.memory_space<vmem>>) attributes {dimension_semantics = [#tpu.dimension_semantics<parallel>], iteration_bounds = array<i64: 1>, scalar_prefetch = 0 : i64, scratch_operands = 0 : i64, tpu.core_type = #tpu.core_type<tc>, window_params = [{transform_indices = @transform_0, window_bounds = array<i64: 8, 128>}, {transform_indices = @transform_1, window_bounds = array<i64: 8, 128>}, {transform_indices = @transform_2, window_bounds = array<i64: 1, 128>}, {transform_indices = @transform_3, window_bounds = array<i64: 1, 128>}, {pipeline_mode = #tpu.pipeline_mode<synchronous>, transform_indices = @transform_4, window_bounds = array<i64: 192, 8>}, {pipeline_mode = #tpu.pipeline_mode<synchronous>, transform_indices = @transform_5, window_bounds = array<i64: 192, 8>}, {pipeline_mode = #tpu.pipeline_mode<synchronous>, transform_indices = @transform_6, window_bounds = array<i64: 192, 1>}, {pipeline_mode = #tpu.pipeline_mode<synchronous>, transform_indices = @transform_7, window_bounds = array<i64: 192, 192>}, {pipeline_mode = #tpu.pipeline_mode<synchronous>, transform_indices = @transform_8, window_bounds = array<i64: 192, 1>}, {pipeline_mode = #tpu.pipeline_mode<synchronous>, transform_indices = @transform_9, window_bounds = array<i64: 8, 192>}, {pipeline_mode = #tpu.pipeline_mode<synchronous>, transform_indices = @transform_10, window_bounds = array<i64: 8, 1>}, {transform_indices = @transform_11, window_bounds = array<i64: 1, 128>}]} {
    %c0 = arith.constant 0 : index
    %c0_0 = arith.constant 0 : index
    %0 = vector.load %arg5[%c0, %c0_0] : memref<192x8xbf16, #tpu.memory_space<vmem>>, vector<192x8xbf16>
    %c0_1 = arith.constant 0 : index
    %c0_2 = arith.constant 0 : index
    %1 = vector.load %arg1[%c0_1, %c0_2] : memref<8x128xbf16, #tpu.memory_space<vmem>>, vector<8x128xbf16>
    %cst = arith.constant dense<0.000000e+00> : vector<192x128xf32>
    %2 = tpu.matmul %0, %1, %cst {dimension_numbers = #tpu.dot_dimension_numbers<[1], [0], [0], [1], [0, 0, 1, 1], [], []>} : vector<192x8xbf16>, vector<8x128xbf16>, vector<192x128xf32> -> vector<192x128xf32>
    %c0_3 = arith.constant 0 : index
    %c0_4 = arith.constant 0 : index
    %3 = vector.load %arg6[%c0_3, %c0_4] : memref<192x8xbf16, #tpu.memory_space<vmem>>, vector<192x8xbf16>
    %c0_5 = arith.constant 0 : index
    %c0_6 = arith.constant 0 : index
    %4 = vector.load %arg2[%c0_5, %c0_6] : memref<8x128xbf16, #tpu.memory_space<vmem>>, vector<8x128xbf16>
    %cst_7 = arith.constant dense<0.000000e+00> : vector<192x128xf32>
    %5 = tpu.matmul %3, %4, %cst_7 {dimension_numbers = #tpu.dot_dimension_numbers<[1], [0], [0], [1], [0, 0, 1, 1], [], []>} : vector<192x8xbf16>, vector<8x128xbf16>, vector<192x128xf32> -> vector<192x128xf32>
    %6 = arith.addf %2, %5 : vector<192x128xf32>
    %c0_8 = arith.constant 0 : index
    %c0_9 = arith.constant 0 : index
    %7 = vector.load %arg7[%c0_8, %c0_9] : memref<192x1xf32, #tpu.memory_space<vmem>>, vector<192x1xf32>
    %8 = vector.broadcast %7 : vector<192x1xf32> to vector<192x128xf32>
    %9 = arith.addf %6, %8 : vector<192x128xf32>
    %cst_10 = arith.constant 0.000000e+00 : f32
    %10 = vector.broadcast %cst_10 : f32 to vector<192x128xf32>
    %11 = arith.maximumf %9, %10 : vector<192x128xf32>
    %c0_11 = arith.constant 0 : index
    %c0_12 = arith.constant 0 : index
    %12 = vector.load %arg8[%c0_11, %c0_12] : memref<192x192xbf16, #tpu.memory_space<vmem>>, vector<192x192xbf16>
    %13 = arith.truncf %11 : vector<192x128xf32> to vector<192x128xbf16>
    %cst_13 = arith.constant dense<0.000000e+00> : vector<192x128xf32>
    %14 = tpu.matmul %12, %13, %cst_13 {dimension_numbers = #tpu.dot_dimension_numbers<[1], [0], [0], [1], [0, 0, 1, 1], [], []>} : vector<192x192xbf16>, vector<192x128xbf16>, vector<192x128xf32> -> vector<192x128xf32>
    %c0_14 = arith.constant 0 : index
    %c0_15 = arith.constant 0 : index
    %15 = vector.load %arg9[%c0_14, %c0_15] : memref<192x1xf32, #tpu.memory_space<vmem>>, vector<192x1xf32>
    %16 = vector.broadcast %15 : vector<192x1xf32> to vector<192x128xf32>
    %17 = arith.addf %14, %16 : vector<192x128xf32>
    %cst_16 = arith.constant 0.000000e+00 : f32
    %18 = vector.broadcast %cst_16 : f32 to vector<192x128xf32>
    %19 = arith.maximumf %17, %18 : vector<192x128xf32>
    %c0_17 = arith.constant 0 : index
    %c0_18 = arith.constant 0 : index
    %20 = vector.load %arg10[%c0_17, %c0_18] : memref<8x192xbf16, #tpu.memory_space<vmem>>, vector<8x192xbf16>
    %21 = arith.truncf %19 : vector<192x128xf32> to vector<192x128xbf16>
    %cst_19 = arith.constant dense<0.000000e+00> : vector<8x128xf32>
    %22 = tpu.matmul %20, %21, %cst_19 {dimension_numbers = #tpu.dot_dimension_numbers<[1], [0], [0], [1], [0, 0, 1, 1], [], []>} : vector<8x192xbf16>, vector<192x128xbf16>, vector<8x128xf32> -> vector<8x128xf32>
    %c0_20 = arith.constant 0 : index
    %c0_21 = arith.constant 0 : index
    %23 = vector.load %arg11[%c0_20, %c0_21] : memref<8x1xf32, #tpu.memory_space<vmem>>, vector<8x1xf32>
    %24 = vector.broadcast %23 : vector<8x1xf32> to vector<8x128xf32>
    %25 = arith.addf %22, %24 : vector<8x128xf32>
    %26 = vector.extract_strided_slice %25 {offsets = [0, 0], sizes = [1, 128], strides = [1, 1]} : vector<8x128xf32> to vector<1x128xf32>
    %c0_22 = arith.constant 0 : index
    %c0_23 = arith.constant 0 : index
    %27 = vector.load %arg3[%c0_22, %c0_23] : memref<1x128xf32, #tpu.memory_space<vmem>>, vector<1x128xf32>
    %cst_24 = arith.constant 1.000000e+00 : f32
    %28 = vector.broadcast %cst_24 : f32 to vector<1x128xf32>
    %29 = arith.subf %28, %27 : vector<1x128xf32>
    %cst_25 = arith.constant 9.900000e-01 : f32
    %30 = vector.broadcast %cst_25 : f32 to vector<1x128xf32>
    %31 = arith.mulf %30, %29 : vector<1x128xf32>
    %32 = vector.extract_strided_slice %25 {offsets = [1, 0], sizes = [1, 128], strides = [1, 1]} : vector<8x128xf32> to vector<1x128xf32>
    %33 = arith.mulf %31, %32 : vector<1x128xf32>
    %34 = arith.addf %26, %33 : vector<1x128xf32>
    %c0_26 = arith.constant 0 : index
    %c0_27 = arith.constant 0 : index
    %35 = vector.load %arg4[%c0_26, %c0_27] : memref<1x128xf32, #tpu.memory_space<vmem>>, vector<1x128xf32>
    %36 = arith.subf %35, %34 : vector<1x128xf32>
    %37 = math.exp %36 : vector<1x128xf32>
    %cst_28 = arith.constant 1.000000e+00 : f32
    %38 = vector.broadcast %cst_28 : f32 to vector<1x128xf32>
    %39 = arith.addf %38, %37 : vector<1x128xf32>
    %cst_29 = arith.constant 1.000000e+00 : f32
    %40 = vector.broadcast %cst_29 : f32 to vector<1x128xf32>
    %41 = arith.divf %40, %39 : vector<1x128xf32>
    %c0_30 = arith.constant 0 : index
    %c0_31 = arith.constant 0 : index
    %42 = vector.load %arg12[%c0_30, %c0_31] : memref<1x128xf32, #tpu.memory_space<vmem>>, vector<1x128xf32>
    tpu.vector_store %arg12[%c0_30, %c0_31], %41 {strides = array<i32>} : memref<1x128xf32, #tpu.memory_space<vmem>>, vector<1x128xf32>,
    return
  }
  func.func @transform_0(%arg0: i32) -> (i32, i32) {
    %c0_i32 = arith.constant 0 : i32
    %c0_i32_0 = arith.constant 0 : i32
    return %c0_i32, %arg0 : i32, i32
  }
  func.func @transform_1(%arg0: i32) -> (i32, i32) {
    %c0_i32 = arith.constant 0 : i32
    %c0_i32_0 = arith.constant 0 : i32
    return %c0_i32, %arg0 : i32, i32
  }
  func.func @transform_2(%arg0: i32) -> (i32, i32) {
    %c0_i32 = arith.constant 0 : i32
    %c0_i32_0 = arith.constant 0 : i32
    return %c0_i32, %arg0 : i32, i32
  }
  func.func @transform_3(%arg0: i32) -> (i32, i32) {
    %c0_i32 = arith.constant 0 : i32
    %c0_i32_0 = arith.constant 0 : i32
    return %c0_i32, %arg0 : i32, i32
  }
  func.func @transform_4(%arg0: i32) -> (i32, i32) {
    %c0_i32 = arith.constant 0 : i32
    %c0_i32_0 = arith.constant 0 : i32
    %c0_i32_1 = arith.constant 0 : i32
    return %c0_i32, %c0_i32_0 : i32, i32
  }
  func.func @transform_5(%arg0: i32) -> (i32, i32) {
    %c0_i32 = arith.constant 0 : i32
    %c0_i32_0 = arith.constant 0 : i32
    %c0_i32_1 = arith.constant 0 : i32
    return %c0_i32, %c0_i32_0 : i32, i32
  }
  func.func @transform_6(%arg0: i32) -> (i32, i32) {
    %c0_i32 = arith.constant 0 : i32
    %c0_i32_0 = arith.constant 0 : i32
    %c0_i32_1 = arith.constant 0 : i32
    return %c0_i32, %c0_i32_0 : i32, i32
  }
  func.func @transform_7(%arg0: i32) -> (i32, i32) {
    %c0_i32 = arith.constant 0 : i32
    %c0_i32_0 = arith.constant 0 : i32
    %c0_i32_1 = arith.constant 0 : i32
    return %c0_i32, %c0_i32_0 : i32, i32
  }
  func.func @transform_8(%arg0: i32) -> (i32, i32) {
    %c0_i32 = arith.constant 0 : i32
    %c0_i32_0 = arith.constant 0 : i32
    %c0_i32_1 = arith.constant 0 : i32
    return %c0_i32, %c0_i32_0 : i32, i32
  }
  func.func @transform_9(%arg0: i32) -> (i32, i32) {
    %c0_i32 = arith.constant 0 : i32
    %c0_i32_0 = arith.constant 0 : i32
    %c0_i32_1 = arith.constant 0 : i32
    return %c0_i32, %c0_i32_0 : i32, i32
  }
  func.func @transform_10(%arg0: i32) -> (i32, i32) {
    %c0_i32 = arith.constant 0 : i32
    %c0_i32_0 = arith.constant 0 : i32
    %c0_i32_1 = arith.constant 0 : i32
    return %c0_i32, %c0_i32_0 : i32, i32
  }
  func.func @transform_11(%arg0: i32) -> (i32, i32) {
    %c0_i32 = arith.constant 0 : i32
    %c0_i32_0 = arith.constant 0 : i32
    return %c0_i32, %arg0 : i32, i32
  }
}

</mosaic_0001>

<llo_original>
// kernel: tpu_custom_call.1
$region0: #{tpu_custom_call.1}
  #allocation0 [shape = 'u32[]', space=smem, size = 0x4, offset = 0x4, fixed_abs, tag = 'smem constant byte address 0x4 - core index']
  #allocation1 [shape = 'u32[72,128]{1,0:T(1,128)}', space=vmem, size = 0x9000, scoped, tag = 'internal scratch']
  %s0 = inlined_call_operand.vmem [shape: bf16[8,8], index: 0, kind: input, shape index: {}]
  %s1 = inlined_call_operand.vmem [shape: bf16[8,8], index: 1, kind: input, shape index: {}]
  %s2 = inlined_call_operand.vmem [shape: f32[1,8], index: 2, kind: input, shape index: {}]
  %s3 = inlined_call_operand.vmem [shape: f32[1,8], index: 3, kind: input, shape index: {}]
  %s4 = inlined_call_operand.vmem [shape: bf16[192,8], index: 4, kind: input, shape index: {}]
  %s5 = inlined_call_operand.vmem [shape: bf16[192,8], index: 5, kind: input, shape index: {}]
  %s6 = inlined_call_operand.vmem [shape: f32[192,1], index: 6, kind: input, shape index: {}]
  %s7 = inlined_call_operand.vmem [shape: bf16[192,192], index: 7, kind: input, shape index: {}]
  %s8 = inlined_call_operand.vmem [shape: f32[192,1], index: 8, kind: input, shape index: {}]
  %s9 = inlined_call_operand.vmem [shape: bf16[8,192], index: 9, kind: input, shape index: {}]
  %s10 = inlined_call_operand.vmem [shape: f32[8,1], index: 10, kind: input, shape index: {}]
  %s11 = inlined_call_operand.hbm [shape: f32[1,8], index: 11, kind: output, shape index: {}]
  %s12 = sld [smem:[#allocation0]]
  $region54: #{tpu_custom_call.1} parent=0
    _
  %s14 = ssub.s32 1, %s12
  %s15 = scalar_select 0, %s14, %s12
  $region1: #{tpu_custom_call.1} parent=0
    #allocation2 [shape = 'u8[512]{0}', space=vmem, size = 0x400, scoped, tag = 'output window, operand 0, single buffered']
    #allocation3 [shape = 's32[1]{0}', space=sflag, size = 0x4, scoped, tag = 'scoped memory for tpu_custom_call.1']
    %16 = vsyncpa [#allocation3], 0
    // Predicated region
    $region2: #{tpu_custom_call.1} parent=1 // pred_check
      _
    $region3: #{tpu_custom_call.1} parent=1 // pred_check_branch
      %18 = sbr.rel (0) target = $region5
    $region4: #{tpu_custom_call.1} parent=1 // pred_region
      _
    $region5: #{tpu_custom_call.1} parent=1 // pred_fallthru
      _
    // Predicated region
    $region6: #{tpu_custom_call.1} parent=1 // pred_check
      _
    $region7: #{tpu_custom_call.1} parent=1 // pred_check_branch
      %20 = sbr.rel (0) target = $region9
    $region8: #{tpu_custom_call.1} parent=1 // pred_region
      _
    $region9: #{tpu_custom_call.1} parent=1 // pred_fallthru
      _
    // Predicated region
    $region10: #{tpu_custom_call.1} parent=1 // pred_check
      _
    $region11: #{tpu_custom_call.1} parent=1 // pred_check_branch
      %22 = sbr.rel (0) target = $region13
    $region12: #{tpu_custom_call.1} parent=1 // pred_region
      _
    $region13: #{tpu_custom_call.1} parent=1 // pred_fallthru
      _
    // Predicated region
    $region14: #{tpu_custom_call.1} parent=1 // pred_check
      _
    $region15: #{tpu_custom_call.1} parent=1 // pred_check_branch
      %24 = sbr.rel (0) target = $region17
    $region16: #{tpu_custom_call.1} parent=1 // pred_region
      _
    $region17: #{tpu_custom_call.1} parent=1 // pred_fallthru
      _
    // Predicated region
    $region18: #{tpu_custom_call.1} parent=1 // pred_check
      _
    $region19: #{tpu_custom_call.1} parent=1 // pred_check_branch
      %26 = sbr.rel (0) target = $region21
    $region20: #{tpu_custom_call.1} parent=1 // pred_region
      _
    $region21: #{tpu_custom_call.1} parent=1 // pred_fallthru
      _
    // Predicated region
    $region22: #{tpu_custom_call.1} parent=1 // pred_check
      _
    $region23: #{tpu_custom_call.1} parent=1 // pred_check_branch
      %28 = sbr.rel (0) target = $region25
    $region24: #{tpu_custom_call.1} parent=1 // pred_region
      _
    $region25: #{tpu_custom_call.1} parent=1 // pred_fallthru
      _
    // Predicated region
    $region26: #{tpu_custom_call.1} parent=1 // pred_check
      _
    $region27: #{tpu_custom_call.1} parent=1 // pred_check_branch
      %30 = sbr.rel (0) target = $region29
    $region28: #{tpu_custom_call.1} parent=1 // pred_region
      _
    $region29: #{tpu_custom_call.1} parent=1 // pred_fallthru
      _
    // Predicated region
    $region30: #{tpu_custom_call.1} parent=1 // pred_check
      _
    $region31: #{tpu_custom_call.1} parent=1 // pred_check_branch
      %32 = sbr.rel (0) target = $region33
    $region32: #{tpu_custom_call.1} parent=1 // pred_region
      _
    $region33: #{tpu_custom_call.1} parent=1 // pred_fallthru
      _
    // Predicated region
    $region34: #{tpu_custom_call.1} parent=1 // pred_check
      _
    $region35: #{tpu_custom_call.1} parent=1 // pred_check_branch
      %34 = sbr.rel (0) target = $region37
    $region36: #{tpu_custom_call.1} parent=1 // pred_region
      _
    $region37: #{tpu_custom_call.1} parent=1 // pred_fallthru
      _
    // Predicated region
    $region38: #{tpu_custom_call.1} parent=1 // pred_check
      _
    $region39: #{tpu_custom_call.1} parent=1 // pred_check_branch
      %36 = sbr.rel (0) target = $region41
    $region40: #{tpu_custom_call.1} parent=1 // pred_region
      _
    $region41: #{tpu_custom_call.1} parent=1 // pred_fallthru
      _
    // Predicated region
    $region42: #{tpu_custom_call.1} parent=1 // pred_check
      _
    $region43: #{tpu_custom_call.1} parent=1 // pred_check_branch
      %38 = sbr.rel (0) target = $region45
    $region44: #{tpu_custom_call.1} parent=1 // pred_region
      _
    $region45: #{tpu_custom_call.1} parent=1 // pred_fallthru
      _
    %v40 = vld [vmem:[%s4] sm:$0xf]
    %v41 = vld [vmem:[%s4 + $0x4] sm:$0xf]
    %v42 = vld [vmem:[%s4 + $0x8] sm:$0xf]
    %v43 = vld [vmem:[%s4 + $0xc] sm:$0xf]
    %v44 = vld [vmem:[%s4 + $0x10] sm:$0xf]
    %v45 = vld [vmem:[%s4 + $0x14] sm:$0xf]
    %v46 = vld [vmem:[%s4 + $0x18] sm:$0xf]
    %v47 = vld [vmem:[%s4 + $0x1c] sm:$0xf]
    %v48 = vld [vmem:[%s4 + $0x20] sm:$0xf]
    %v49 = vld [vmem:[%s4 + $0x24] sm:$0xf]
    %v50 = vld [vmem:[%s4 + $0x28] sm:$0xf]
    %v51 = vld [vmem:[%s4 + $0x2c] sm:$0xf]
    %v52 = vld [vmem:[%s4 + $0x30] sm:$0xf]
    %v53 = vld [vmem:[%s4 + $0x34] sm:$0xf]
    %v54 = vld [vmem:[%s4 + $0x38] sm:$0xf]
    %v55 = vld [vmem:[%s4 + $0x3c] sm:$0xf]
    %v56 = vld [vmem:[%s4 + $0x40] sm:$0xf]
    %v57 = vld [vmem:[%s4 + $0x44] sm:$0xf]
    %v58 = vld [vmem:[%s4 + $0x48] sm:$0xf]
    %v59 = vld [vmem:[%s4 + $0x4c] sm:$0xf]
    %v60 = vld [vmem:[%s4 + $0x50] sm:$0xf]
    %v61 = vld [vmem:[%s4 + $0x54] sm:$0xf]
    %v62 = vld [vmem:[%s4 + $0x58] sm:$0xf]
    %v63 = vld [vmem:[%s4 + $0x5c] sm:$0xf]
    %v64 = vld [vmem:[%s0] sm:$0xf]
    %v65 = vld [vmem:[%s5] sm:$0xf]
    %v66 = vld [vmem:[%s5 + $0x4] sm:$0xf]
    %v67 = vld [vmem:[%s5 + $0x8] sm:$0xf]
    %v68 = vld [vmem:[%s5 + $0xc] sm:$0xf]
    %v69 = vld [vmem:[%s5 + $0x10] sm:$0xf]
    %v70 = vld [vmem:[%s5 + $0x14] sm:$0xf]
    %v71 = vld [vmem:[%s5 + $0x18] sm:$0xf]
    %v72 = vld [vmem:[%s5 + $0x1c] sm:$0xf]
    %v73 = vld [vmem:[%s5 + $0x20] sm:$0xf]
    %v74 = vld [vmem:[%s5 + $0x24] sm:$0xf]
    %v75 = vld [vmem:[%s5 + $0x28] sm:$0xf]
    %v76 = vld [vmem:[%s5 + $0x2c] sm:$0xf]
    %v77 = vld [vmem:[%s5 + $0x30] sm:$0xf]
    %v78 = vld [vmem:[%s5 + $0x34] sm:$0xf]
    %v79 = vld [vmem:[%s5 + $0x38] sm:$0xf]
    %v80 = vld [vmem:[%s5 + $0x3c] sm:$0xf]
    %v81 = vld [vmem:[%s5 + $0x40] sm:$0xf]
    %v82 = vld [vmem:[%s5 + $0x44] sm:$0xf]
    %v83 = vld [vmem:[%s5 + $0x48] sm:$0xf]
    %v84 = vld [vmem:[%s5 + $0x4c] sm:$0xf]
    %v85 = vld [vmem:[%s5 + $0x50] sm:$0xf]
    %v86 = vld [vmem:[%s5 + $0x54] sm:$0xf]
    %v87 = vld [vmem:[%s5 + $0x58] sm:$0xf]
    %v88 = vld [vmem:[%s5 + $0x5c] sm:$0xf]
    %v89 = vld [vmem:[%s1] sm:$0xf]
    %v114 = vunpack.c.l.b16 %v65
    %v115 = vunpack.c.l.b16 %v66
    %v116 = vunpack.c.l.b16 %v67
    %v117 = vunpack.c.l.b16 %v68
    %v118 = vunpack.c.l.b16 %v69
    %v119 = vunpack.c.l.b16 %v70
    %v120 = vunpack.c.l.b16 %v71
    %v121 = vunpack.c.l.b16 %v72
    %v122 = vunpack.c.l.b16 %v73
    %v123 = vunpack.c.l.b16 %v74
    %v124 = vunpack.c.l.b16 %v75
    %v125 = vunpack.c.l.b16 %v76
    %v126 = vunpack.c.l.b16 %v77
    %v127 = vunpack.c.l.b16 %v78
    %v128 = vunpack.c.l.b16 %v79
    %v129 = vunpack.c.l.b16 %v80
    %v130 = vunpack.c.l.b16 %v81
    %v131 = vunpack.c.l.b16 %v82
    %v132 = vunpack.c.l.b16 %v83
    %v133 = vunpack.c.l.b16 %v84
    %v134 = vunpack.c.l.b16 %v85
    %v135 = vunpack.c.l.b16 %v86
    %v136 = vunpack.c.l.b16 %v87
    %v137 = vunpack.c.l.b16 %v88
    %v138 = vpack.c.b16 %v115, %v114
    %v139 = vpack.c.b16 %v117, %v116
    %v140 = vpack.c.b16 %v119, %v118
    %v141 = vpack.c.b16 %v121, %v120
    %v142 = vpack.c.b16 %v123, %v122
    %v143 = vpack.c.b16 %v125, %v124
    %v144 = vpack.c.b16 %v127, %v126
    %v145 = vpack.c.b16 %v129, %v128
    %v146 = vpack.c.b16 %v131, %v130
    %v147 = vpack.c.b16 %v133, %v132
    %v148 = vpack.c.b16 %v135, %v134
    %v149 = vpack.c.b16 %v137, %v136
    %vm150 = vcmask 64512
    %v152 = vsel %vm150, %v138, 0
    %v155 = vsel %vm150, %v139, 0
    %v158 = vsel %vm150, %v140, 0
    %v161 = vsel %vm150, %v141, 0
    %v164 = vsel %vm150, %v142, 0
    %v167 = vsel %vm150, %v143, 0
    %v170 = vsel %vm150, %v144, 0
    %v173 = vsel %vm150, %v145, 0
    %v176 = vsel %vm150, %v146, 0
    %v179 = vsel %vm150, %v147, 0
    %v182 = vsel %vm150, %v148, 0
    %v185 = vsel %vm150, %v149, 0
    %vm187 = vcmask 1043456
    %v189 = vsel %vm187, %v89, 0
    %191 = vmatpush.bf16.msra.mxu0 0
    %192 = vmatpush.bf16.msra.mxu0 0
    %193 = vmatpush.bf16.msra.mxu0 0
    %194 = vmatpush.bf16.msra.mxu0 0
    %195 = vmatpush.bf16.msra.mxu0 0
    %196 = vmatpush.bf16.msra.mxu0 0
    %197 = vmatpush.bf16.msra.mxu0 0
    %198 = vmatpush.bf16.msra.mxu0 %v189
    %199 = vmatmul.bf16.gmra.mxu0 %v152
    %v200 = vpop.f32.mrf.mxu0
    %v201 = vadd.f32 0.0, %v200
    %v202 = vpop.f32.mrf.mxu0
    %v203 = vadd.f32 0.0, %v202
    %204 = vmatmul.bf16.gmra.mxu0 %v155
    %v205 = vpop.f32.mrf.mxu0
    %v206 = vadd.f32 0.0, %v205
    %v207 = vpop.f32.mrf.mxu0
    %v208 = vadd.f32 0.0, %v207
    %209 = vmatmul.bf16.gmra.mxu0 %v158
    %v210 = vpop.f32.mrf.mxu0
    %v211 = vadd.f32 0.0, %v210
    %v212 = vpop.f32.mrf.mxu0
    %v213 = vadd.f32 0.0, %v212
    %214 = vmatmul.bf16.gmra.mxu0 %v161
    %v215 = vpop.f32.mrf.mxu0
    %v216 = vadd.f32 0.0, %v215
    %v217 = vpop.f32.mrf.mxu0
    %v218 = vadd.f32 0.0, %v217
    %219 = vmatmul.bf16.gmra.mxu0 %v164
    %v220 = vpop.f32.mrf.mxu0
    %v221 = vadd.f32 0.0, %v220
    %v222 = vpop.f32.mrf.mxu0
    %v223 = vadd.f32 0.0, %v222
    %224 = vmatmul.bf16.gmra.mxu0 %v167
    %v225 = vpop.f32.mrf.mxu0
    %v226 = vadd.f32 0.0, %v225
    %v227 = vpop.f32.mrf.mxu0
    %v228 = vadd.f32 0.0, %v227
    %229 = vmatmul.bf16.gmra.mxu0 %v170
    %v230 = vpop.f32.mrf.mxu0
    %v231 = vadd.f32 0.0, %v230
    %v232 = vpop.f32.mrf.mxu0
    %v233 = vadd.f32 0.0, %v232
    %234 = vmatmul.bf16.gmra.mxu0 %v173
    %v235 = vpop.f32.mrf.mxu0
    %v236 = vadd.f32 0.0, %v235
    %v237 = vpop.f32.mrf.mxu0
    %v238 = vadd.f32 0.0, %v237
    %239 = vmatmul.bf16.gmra.mxu0 %v176
    %v240 = vpop.f32.mrf.mxu0
    %v241 = vadd.f32 0.0, %v240
    %v242 = vpop.f32.mrf.mxu0
    %v243 = vadd.f32 0.0, %v242
    %244 = vmatmul.bf16.gmra.mxu0 %v179
    %v245 = vpop.f32.mrf.mxu0
    %v246 = vadd.f32 0.0, %v245
    %v247 = vpop.f32.mrf.mxu0
    %v248 = vadd.f32 0.0, %v247
    %249 = vmatmul.bf16.gmra.mxu0 %v182
    %v250 = vpop.f32.mrf.mxu0
    %v251 = vadd.f32 0.0, %v250
    %v252 = vpop.f32.mrf.mxu0
    %v253 = vadd.f32 0.0, %v252
    %254 = vmatmul.bf16.gmra.mxu0 %v185
    %v255 = vpop.f32.mrf.mxu0
    %v256 = vadd.f32 0.0, %v255
    %v257 = vpop.f32.mrf.mxu0
    %v258 = vadd.f32 0.0, %v257
    %259 = vdwg.mxu0
    %v284 = vunpack.c.l.b16 %v40
    %v285 = vunpack.c.l.b16 %v41
    %v286 = vunpack.c.l.b16 %v42
    %v287 = vunpack.c.l.b16 %v43
    %v288 = vunpack.c.l.b16 %v44
    %v289 = vunpack.c.l.b16 %v45
    %v290 = vunpack.c.l.b16 %v46
    %v291 = vunpack.c.l.b16 %v47
    %v292 = vunpack.c.l.b16 %v48
    %v293 = vunpack.c.l.b16 %v49
    %v294 = vunpack.c.l.b16 %v50
    %v295 = vunpack.c.l.b16 %v51
    %v296 = vunpack.c.l.b16 %v52
    %v297 = vunpack.c.l.b16 %v53
    %v298 = vunpack.c.l.b16 %v54
    %v299 = vunpack.c.l.b16 %v55
    %v300 = vunpack.c.l.b16 %v56
    %v301 = vunpack.c.l.b16 %v57
    %v302 = vunpack.c.l.b16 %v58
    %v303 = vunpack.c.l.b16 %v59
    %v304 = vunpack.c.l.b16 %v60
    %v305 = vunpack.c.l.b16 %v61
    %v306 = vunpack.c.l.b16 %v62
    %v307 = vunpack.c.l.b16 %v63
    %v308 = vpack.c.b16 %v285, %v284
    %v309 = vpack.c.b16 %v287, %v286
    %v310 = vpack.c.b16 %v289, %v288
    %v311 = vpack.c.b16 %v291, %v290
    %v312 = vpack.c.b16 %v293, %v292
    %v313 = vpack.c.b16 %v295, %v294
    %v314 = vpack.c.b16 %v297, %v296
    %v315 = vpack.c.b16 %v299, %v298
    %v316 = vpack.c.b16 %v301, %v300
    %v317 = vpack.c.b16 %v303, %v302
    %v318 = vpack.c.b16 %v305, %v304
    %v319 = vpack.c.b16 %v307, %v306
    %v321 = vsel %vm150, %v308, 0
    %v324 = vsel %vm150, %v309, 0
    %v327 = vsel %vm150, %v310, 0
    %v330 = vsel %vm150, %v311, 0
    %v333 = vsel %vm150, %v312, 0
    %v336 = vsel %vm150, %v313, 0
    %v339 = vsel %vm150, %v314, 0
    %v342 = vsel %vm150, %v315, 0
    %v345 = vsel %vm150, %v316, 0
    %v348 = vsel %vm150, %v317, 0
    %v351 = vsel %vm150, %v318, 0
    %v354 = vsel %vm150, %v319, 0
    %v357 = vsel %vm187, %v64, 0
    %359 = vmatpush.bf16.msra.mxu0 0
    %360 = vmatpush.bf16.msra.mxu0 0
    %361 = vmatpush.bf16.msra.mxu0 0
    %362 = vmatpush.bf16.msra.mxu0 0
    %363 = vmatpush.bf16.msra.mxu0 0
    %364 = vmatpush.bf16.msra.mxu0 0
    %365 = vmatpush.bf16.msra.mxu0 0
    %366 = vmatpush.bf16.msra.mxu0 %v357
    %367 = vmatmul.bf16.gmra.mxu0 %v321
    %v368 = vpop.f32.mrf.mxu0
    %v369 = vadd.f32 %v201, %v368
    %v370 = vpop.f32.mrf.mxu0
    %v371 = vadd.f32 %v203, %v370
    %372 = vmatmul.bf16.gmra.mxu0 %v324
    %v373 = vpop.f32.mrf.mxu0
    %v374 = vadd.f32 %v206, %v373
    %v375 = vpop.f32.mrf.mxu0
    %v376 = vadd.f32 %v208, %v375
    %377 = vmatmul.bf16.gmra.mxu0 %v327
    %v378 = vpop.f32.mrf.mxu0
    %v379 = vadd.f32 %v211, %v378
    %v380 = vpop.f32.mrf.mxu0
    %v381 = vadd.f32 %v213, %v380
    %382 = vmatmul.bf16.gmra.mxu0 %v330
    %v383 = vpop.f32.mrf.mxu0
    %v384 = vadd.f32 %v216, %v383
    %v385 = vpop.f32.mrf.mxu0
    %v386 = vadd.f32 %v218, %v385
    %387 = vmatmul.bf16.gmra.mxu0 %v333
    %v388 = vpop.f32.mrf.mxu0
    %v389 = vadd.f32 %v221, %v388
    %v390 = vpop.f32.mrf.mxu0
    %v391 = vadd.f32 %v223, %v390
    %392 = vmatmul.bf16.gmra.mxu0 %v336
    %v393 = vpop.f32.mrf.mxu0
    %v394 = vadd.f32 %v226, %v393
    %v395 = vpop.f32.mrf.mxu0
    %v396 = vadd.f32 %v228, %v395
    %397 = vmatmul.bf16.gmra.mxu0 %v339
    %v398 = vpop.f32.mrf.mxu0
    %v399 = vadd.f32 %v231, %v398
    %v400 = vpop.f32.mrf.mxu0
    %v401 = vadd.f32 %v233, %v400
    %402 = vmatmul.bf16.gmra.mxu0 %v342
    %v403 = vpop.f32.mrf.mxu0
    %v404 = vadd.f32 %v236, %v403
    %v405 = vpop.f32.mrf.mxu0
    %v406 = vadd.f32 %v238, %v405
    %407 = vmatmul.bf16.gmra.mxu0 %v345
    %v408 = vpop.f32.mrf.mxu0
    %v409 = vadd.f32 %v241, %v408
    %v410 = vpop.f32.mrf.mxu0
    %v411 = vadd.f32 %v243, %v410
    %412 = vmatmul.bf16.gmra.mxu0 %v348
    %v413 = vpop.f32.mrf.mxu0
    %v414 = vadd.f32 %v246, %v413
    %v415 = vpop.f32.mrf.mxu0
    %v416 = vadd.f32 %v248, %v415
    %417 = vmatmul.bf16.gmra.mxu0 %v351
    %v418 = vpop.f32.mrf.mxu0
    %v419 = vadd.f32 %v251, %v418
    %v420 = vpop.f32.mrf.mxu0
    %v421 = vadd.f32 %v253, %v420
    %422 = vmatmul.bf16.gmra.mxu0 %v354
    %v423 = vpop.f32.mrf.mxu0
    %v424 = vadd.f32 %v256, %v423
    %v425 = vpop.f32.mrf.mxu0
    %v426 = vadd.f32 %v258, %v425
    %427 = vdwg.mxu0
    %v428 = vld [vmem:[%s6] sm:$0xff]
    %v429 = vld [vmem:[%s6 + $0x8] sm:$0xff]
    %v430 = vld [vmem:[%s6 + $0x10] sm:$0xff]
    %v431 = vld [vmem:[%s6 + $0x18] sm:$0xff]
    %v432 = vld [vmem:[%s6 + $0x20] sm:$0xff]
    %v433 = vld [vmem:[%s6 + $0x28] sm:$0xff]
    %v434 = vld [vmem:[%s6 + $0x30] sm:$0xff]
    %v435 = vld [vmem:[%s6 + $0x38] sm:$0xff]
    %v436 = vld [vmem:[%s6 + $0x40] sm:$0xff]
    %v437 = vld [vmem:[%s6 + $0x48] sm:$0xff]
    %v438 = vld [vmem:[%s6 + $0x50] sm:$0xff]
    %v439 = vld [vmem:[%s6 + $0x58] sm:$0xff]
    %v440 = vld [vmem:[%s6 + $0x60] sm:$0xff]
    %v441 = vld [vmem:[%s6 + $0x68] sm:$0xff]
    %v442 = vld [vmem:[%s6 + $0x70] sm:$0xff]
    %v443 = vld [vmem:[%s6 + $0x78] sm:$0xff]
    %v444 = vld [vmem:[%s6 + $0x80] sm:$0xff]
    %v445 = vld [vmem:[%s6 + $0x88] sm:$0xff]
    %v446 = vld [vmem:[%s6 + $0x90] sm:$0xff]
    %v447 = vld [vmem:[%s6 + $0x98] sm:$0xff]
    %v448 = vld [vmem:[%s6 + $0xa0] sm:$0xff]
    %v449 = vld [vmem:[%s6 + $0xa8] sm:$0xff]
    %v450 = vld [vmem:[%s6 + $0xb0] sm:$0xff]
    %v451 = vld [vmem:[%s6 + $0xb8] sm:$0xff]
    %453 = vset.pattern.permute.xlu0 0
    %454 = vperm.xlu0 %453, %v428
    %v455 = vpop.permute.xlu0 %454
    %458 = vset.pattern.permute.xlu0 0
    %459 = vperm.xlu0 %458, %v429
    %v460 = vpop.permute.xlu0 %459
    %463 = vset.pattern.permute.xlu0 0
    %464 = vperm.xlu0 %463, %v430
    %v465 = vpop.permute.xlu0 %464
    %468 = vset.pattern.permute.xlu0 0
    %469 = vperm.xlu0 %468, %v431
    %v470 = vpop.permute.xlu0 %469
    %473 = vset.pattern.permute.xlu0 0
    %474 = vperm.xlu0 %473, %v432
    %v475 = vpop.permute.xlu0 %474
    %478 = vset.pattern.permute.xlu0 0
    %479 = vperm.xlu0 %478, %v433
    %v480 = vpop.permute.xlu0 %479
    %483 = vset.pattern.permute.xlu0 0
    %484 = vperm.xlu0 %483, %v434
    %v485 = vpop.permute.xlu0 %484
    %488 = vset.pattern.permute.xlu0 0
    %489 = vperm.xlu0 %488, %v435
    %v490 = vpop.permute.xlu0 %489
    %493 = vset.pattern.permute.xlu0 0
    %494 = vperm.xlu0 %493, %v436
    %v495 = vpop.permute.xlu0 %494
    %498 = vset.pattern.permute.xlu0 0
    %499 = vperm.xlu0 %498, %v437
    %v500 = vpop.permute.xlu0 %499
    %503 = vset.pattern.permute.xlu0 0
    %504 = vperm.xlu0 %503, %v438
    %v505 = vpop.permute.xlu0 %504
    %508 = vset.pattern.permute.xlu0 0
    %509 = vperm.xlu0 %508, %v439
    %v510 = vpop.permute.xlu0 %509
    %513 = vset.pattern.permute.xlu0 0
    %514 = vperm.xlu0 %513, %v440
    %v515 = vpop.permute.xlu0 %514
    %518 = vset.pattern.permute.xlu0 0
    %519 = vperm.xlu0 %518, %v441
    %v520 = vpop.permute.xlu0 %519
    %523 = vset.pattern.permute.xlu0 0
    %524 = vperm.xlu0 %523, %v442
    %v525 = vpop.permute.xlu0 %524
    %528 = vset.pattern.permute.xlu0 0
    %529 = vperm.xlu0 %528, %v443
    %v530 = vpop.permute.xlu0 %529
    %533 = vset.pattern.permute.xlu0 0
    %534 = vperm.xlu0 %533, %v444
    %v535 = vpop.permute.xlu0 %534
    %538 = vset.pattern.permute.xlu0 0
    %539 = vperm.xlu0 %538, %v445
    %v540 = vpop.permute.xlu0 %539
    %543 = vset.pattern.permute.xlu0 0
    %544 = vperm.xlu0 %543, %v446
    %v545 = vpop.permute.xlu0 %544
    %548 = vset.pattern.permute.xlu0 0
    %549 = vperm.xlu0 %548, %v447
    %v550 = vpop.permute.xlu0 %549
    %553 = vset.pattern.permute.xlu0 0
    %554 = vperm.xlu0 %553, %v448
    %v555 = vpop.permute.xlu0 %554
    %558 = vset.pattern.permute.xlu0 0
    %559 = vperm.xlu0 %558, %v449
    %v560 = vpop.permute.xlu0 %559
    %563 = vset.pattern.permute.xlu0 0
    %564 = vperm.xlu0 %563, %v450
    %v565 = vpop.permute.xlu0 %564
    %568 = vset.pattern.permute.xlu0 0
    %569 = vperm.xlu0 %568, %v451
    %v570 = vpop.permute.xlu0 %569
    %v572 = vadd.f32 %v369, %v455
    %v573 = vadd.f32 %v371, %v460
    %v574 = vadd.f32 %v374, %v465
    %v575 = vadd.f32 %v376, %v470
    %v576 = vadd.f32 %v379, %v475
    %v577 = vadd.f32 %v381, %v480
    %v578 = vadd.f32 %v384, %v485
    %v579 = vadd.f32 %v386, %v490
    %v580 = vadd.f32 %v389, %v495
    %v581 = vadd.f32 %v391, %v500
    %v582 = vadd.f32 %v394, %v505
    %v583 = vadd.f32 %v396, %v510
    %v584 = vadd.f32 %v399, %v515
    %v585 = vadd.f32 %v401, %v520
    %v586 = vadd.f32 %v404, %v525
    %v587 = vadd.f32 %v406, %v530
    %v588 = vadd.f32 %v409, %v535
    %v589 = vadd.f32 %v411, %v540
    %v590 = vadd.f32 %v414, %v545
    %v591 = vadd.f32 %v416, %v550
    %v592 = vadd.f32 %v419, %v555
    %v593 = vadd.f32 %v421, %v560
    %v594 = vadd.f32 %v424, %v565
    %v595 = vadd.f32 %v426, %v570
    %v596 = vmax.f32 %v572, 0.0
    %v597 = vmax.f32 %v573, 0.0
    %v598 = vmax.f32 %v574, 0.0
    %v599 = vmax.f32 %v575, 0.0
    %v600 = vmax.f32 %v576, 0.0
    %v601 = vmax.f32 %v577, 0.0
    %v602 = vmax.f32 %v578, 0.0
    %v603 = vmax.f32 %v579, 0.0
    %v604 = vmax.f32 %v580, 0.0
    %v605 = vmax.f32 %v581, 0.0
    %v606 = vmax.f32 %v582, 0.0
    %v607 = vmax.f32 %v583, 0.0
    %v608 = vmax.f32 %v584, 0.0
    %v609 = vmax.f32 %v585, 0.0
    %v610 = vmax.f32 %v586, 0.0
    %v611 = vmax.f32 %v587, 0.0
    %v612 = vmax.f32 %v588, 0.0
    %v613 = vmax.f32 %v589, 0.0
    %v614 = vmax.f32 %v590, 0.0
    %v615 = vmax.f32 %v591, 0.0
    %v616 = vmax.f32 %v592, 0.0
    %v617 = vmax.f32 %v593, 0.0
    %v618 = vmax.f32 %v594, 0.0
    %v619 = vmax.f32 %v595, 0.0
    %v620 = vld [vmem:[%s7] sm:$0xff]
    %v621 = vld [vmem:[%s7 + $0x8] sm:$0xff]
    %v622 = vld [vmem:[%s7 + $0x10] sm:$0xff]
    %v623 = vld [vmem:[%s7 + $0x18] sm:$0xff]
    %v624 = vld [vmem:[%s7 + $0x20] sm:$0xff]
    %v625 = vld [vmem:[%s7 + $0x28] sm:$0xff]
    %v626 = vld [vmem:[%s7 + $0x30] sm:$0xff]
    %v627 = vld [vmem:[%s7 + $0x38] sm:$0xff]
    %v628 = vld [vmem:[%s7 + $0x40] sm:$0xff]
    %v629 = vld [vmem:[%s7 + $0x48] sm:$0xff]
    %v630 = vld [vmem:[%s7 + $0x50] sm:$0xff]
    %v631 = vld [vmem:[%s7 + $0x58] sm:$0xff]
    %v632 = vld [vmem:[%s7 + $0x60] sm:$0xff]
    %v633 = vld [vmem:[%s7 + $0x68] sm:$0xff]
    %v634 = vld [vmem:[%s7 + $0x70] sm:$0xff]
    %v635 = vld [vmem:[%s7 + $0x78] sm:$0xff]
    %v636 = vld [vmem:[%s7 + $0x80] sm:$0xff]
    %v637 = vld [vmem:[%s7 + $0x88] sm:$0xff]
    %v638 = vld [vmem:[%s7 + $0x90] sm:$0xff]
    %v639 = vld [vmem:[%s7 + $0x98] sm:$0xff]
    %v640 = vld [vmem:[%s7 + $0xa0] sm:$0xff]
    %v641 = vld [vmem:[%s7 + $0xa8] sm:$0xff]
    %v642 = vld [vmem:[%s7 + $0xb0] sm:$0xff]
    %v643 = vld [vmem:[%s7 + $0xb8] sm:$0xff]
    %v644 = vpack.c.bf16 %v597, %v596
    %v645 = vpack.c.bf16 %v599, %v598
    %v646 = vpack.c.bf16 %v601, %v600
    %v647 = vpack.c.bf16 %v603, %v602
    %v648 = vpack.c.bf16 %v605, %v604
    %v649 = vpack.c.bf16 %v607, %v606
    %v650 = vpack.c.bf16 %v609, %v608
    %v651 = vpack.c.bf16 %v611, %v610
    %v652 = vpack.c.bf16 %v613, %v612
    %v653 = vpack.c.bf16 %v615, %v614
    %v654 = vpack.c.bf16 %v617, %v616
    %v655 = vpack.c.bf16 %v619, %v618
    %v656 = vld [vmem:[%s8] sm:$0xff]
    %v657 = vld [vmem:[%s8 + $0x8] sm:$0xff]
    %v658 = vld [vmem:[%s8 + $0x10] sm:$0xff]
    %v659 = vld [vmem:[%s8 + $0x18] sm:$0xff]
    %v660 = vld [vmem:[%s8 + $0x20] sm:$0xff]
    %v661 = vld [vmem:[%s8 + $0x28] sm:$0xff]
    %v662 = vld [vmem:[%s8 + $0x30] sm:$0xff]
    %v663 = vld [vmem:[%s8 + $0x38] sm:$0xff]
    %v664 = vld [vmem:[%s8 + $0x40] sm:$0xff]
    %v665 = vld [vmem:[%s8 + $0x48] sm:$0xff]
    %v666 = vld [vmem:[%s8 + $0x50] sm:$0xff]
    %v667 = vld [vmem:[%s8 + $0x58] sm:$0xff]
    %v668 = vld [vmem:[%s8 + $0x60] sm:$0xff]
    %v669 = vld [vmem:[%s8 + $0x68] sm:$0xff]
    %v670 = vld [vmem:[%s8 + $0x70] sm:$0xff]
    %v671 = vld [vmem:[%s8 + $0x78] sm:$0xff]
    %v672 = vld [vmem:[%s8 + $0x80] sm:$0xff]
    %v673 = vld [vmem:[%s8 + $0x88] sm:$0xff]
    %v674 = vld [vmem:[%s8 + $0x90] sm:$0xff]
    %v675 = vld [vmem:[%s8 + $0x98] sm:$0xff]
    %v676 = vld [vmem:[%s8 + $0xa0] sm:$0xff]
    %v677 = vld [vmem:[%s8 + $0xa8] sm:$0xff]
    %v678 = vld [vmem:[%s8 + $0xb0] sm:$0xff]
    %v679 = vld [vmem:[%s8 + $0xb8] sm:$0xff]
    %681 = vset.pattern.permute.xlu0 0
    %682 = vperm.xlu0 %681, %v656
    %v683 = vpop.permute.xlu0 %682
    %686 = vset.pattern.permute.xlu0 0
    %687 = vperm.xlu0 %686, %v657
    %v688 = vpop.permute.xlu0 %687
    %691 = vset.pattern.permute.xlu0 0
    %692 = vperm.xlu0 %691, %v658
    %v693 = vpop.permute.xlu0 %692
    %696 = vset.pattern.permute.xlu0 0
    %697 = vperm.xlu0 %696, %v659
    %v698 = vpop.permute.xlu0 %697
    %701 = vset.pattern.permute.xlu0 0
    %702 = vperm.xlu0 %701, %v660
    %v703 = vpop.permute.xlu0 %702
    %706 = vset.pattern.permute.xlu0 0
    %707 = vperm.xlu0 %706, %v661
    %v708 = vpop.permute.xlu0 %707
    %711 = vset.pattern.permute.xlu0 0
    %712 = vperm.xlu0 %711, %v662
    %v713 = vpop.permute.xlu0 %712
    %716 = vset.pattern.permute.xlu0 0
    %717 = vperm.xlu0 %716, %v663
    %v718 = vpop.permute.xlu0 %717
    %721 = vset.pattern.permute.xlu0 0
    %722 = vperm.xlu0 %721, %v664
    %v723 = vpop.permute.xlu0 %722
    %726 = vset.pattern.permute.xlu0 0
    %727 = vperm.xlu0 %726, %v665
    %v728 = vpop.permute.xlu0 %727
    %731 = vset.pattern.permute.xlu0 0
    %732 = vperm.xlu0 %731, %v666
    %v733 = vpop.permute.xlu0 %732
    %736 = vset.pattern.permute.xlu0 0
    %737 = vperm.xlu0 %736, %v667
    %v738 = vpop.permute.xlu0 %737
    %741 = vset.pattern.permute.xlu0 0
    %742 = vperm.xlu0 %741, %v668
    %v743 = vpop.permute.xlu0 %742
    %746 = vset.pattern.permute.xlu0 0
    %747 = vperm.xlu0 %746, %v669
    %v748 = vpop.permute.xlu0 %747
    %751 = vset.pattern.permute.xlu0 0
    %752 = vperm.xlu0 %751, %v670
    %v753 = vpop.permute.xlu0 %752
    %756 = vset.pattern.permute.xlu0 0
    %757 = vperm.xlu0 %756, %v671
    %v758 = vpop.permute.xlu0 %757
    %761 = vset.pattern.permute.xlu0 0
    %762 = vperm.xlu0 %761, %v672
    %v763 = vpop.permute.xlu0 %762
    %766 = vset.pattern.permute.xlu0 0
    %767 = vperm.xlu0 %766, %v673
    %v768 = vpop.permute.xlu0 %767
    %771 = vset.pattern.permute.xlu0 0
    %772 = vperm.xlu0 %771, %v674
    %v773 = vpop.permute.xlu0 %772
    %776 = vset.pattern.permute.xlu0 0
    %777 = vperm.xlu0 %776, %v675
    %v778 = vpop.permute.xlu0 %777
    %781 = vset.pattern.permute.xlu0 0
    %782 = vperm.xlu0 %781, %v676
    %v783 = vpop.permute.xlu0 %782
    %786 = vset.pattern.permute.xlu0 0
    %787 = vperm.xlu0 %786, %v677
    %v788 = vpop.permute.xlu0 %787
    %791 = vset.pattern.permute.xlu0 0
    %792 = vperm.xlu0 %791, %v678
    %v793 = vpop.permute.xlu0 %792
    %796 = vset.pattern.permute.xlu0 0
    %797 = vperm.xlu0 %796, %v679
    %v798 = vpop.permute.xlu0 %797
    %v824 = vunpack.c.l.b16 %v620
    %v825 = vunpack.c.h.b16 %v620
    %v826 = vunpack.c.l.b16 %v621
    %v827 = vunpack.c.h.b16 %v621
    %v828 = vunpack.c.l.b16 %v622
    %v829 = vunpack.c.h.b16 %v622
    %v830 = vunpack.c.l.b16 %v623
    %v831 = vunpack.c.h.b16 %v623
    %v832 = vunpack.c.l.b16 %v624
    %v833 = vunpack.c.h.b16 %v624
    %v834 = vunpack.c.l.b16 %v625
    %v835 = vunpack.c.h.b16 %v625
    %v836 = vunpack.c.l.b16 %v626
    %v837 = vunpack.c.h.b16 %v626
    %v838 = vunpack.c.l.b16 %v627
    %v839 = vunpack.c.h.b16 %v627
    %v840 = vunpack.c.l.b16 %v628
    %v841 = vunpack.c.h.b16 %v628
    %v842 = vunpack.c.l.b16 %v629
    %v843 = vunpack.c.h.b16 %v629
    %v844 = vunpack.c.l.b16 %v630
    %v845 = vunpack.c.h.b16 %v630
    %v846 = vunpack.c.l.b16 %v631
    %v847 = vunpack.c.h.b16 %v631
    %v848 = vunpack.c.l.b16 %v632
    %v849 = vunpack.c.h.b16 %v632
    %v850 = vunpack.c.l.b16 %v633
    %v851 = vunpack.c.h.b16 %v633
    %v852 = vunpack.c.l.b16 %v634
    %v853 = vunpack.c.h.b16 %v634
    %v854 = vunpack.c.l.b16 %v635
    %v855 = vunpack.c.h.b16 %v635
    %v856 = vunpack.c.l.b16 %v636
    %v857 = vunpack.c.h.b16 %v636
    %v858 = vunpack.c.l.b16 %v637
    %v859 = vunpack.c.h.b16 %v637
    %v860 = vunpack.c.l.b16 %v638
    %v861 = vunpack.c.h.b16 %v638
    %v862 = vunpack.c.l.b16 %v639
    %v863 = vunpack.c.h.b16 %v639
    %v864 = vunpack.c.l.b16 %v640
    %v865 = vunpack.c.h.b16 %v640
    %v866 = vunpack.c.l.b16 %v641
    %v867 = vunpack.c.h.b16 %v641
    %v868 = vunpack.c.l.b16 %v642
    %v869 = vunpack.c.h.b16 %v642
    %v870 = vunpack.c.l.b16 %v643
    %v871 = vunpack.c.h.b16 %v643
    %v872 = vpack.c.b16 %v826, %v824
    %v873 = vpack.c.b16 %v827, %v825
    %v874 = vpack.c.b16 %v830, %v828
    %v875 = vpack.c.b16 %v831, %v829
    %v876 = vpack.c.b16 %v834, %v832
    %v877 = vpack.c.b16 %v835, %v833
    %v878 = vpack.c.b16 %v838, %v836
    %v879 = vpack.c.b16 %v839, %v837
    %v880 = vpack.c.b16 %v842, %v840
    %v881 = vpack.c.b16 %v843, %v841
    %v882 = vpack.c.b16 %v846, %v844
    %v883 = vpack.c.b16 %v847, %v845
    %v884 = vpack.c.b16 %v850, %v848
    %v885 = vpack.c.b16 %v851, %v849
    %v886 = vpack.c.b16 %v854, %v852
    %v887 = vpack.c.b16 %v855, %v853
    %v888 = vpack.c.b16 %v858, %v856
    %v889 = vpack.c.b16 %v859, %v857
    %v890 = vpack.c.b16 %v862, %v860
    %v891 = vpack.c.b16 %v863, %v861
    %v892 = vpack.c.b16 %v866, %v864
    %v893 = vpack.c.b16 %v867, %v865
    %v894 = vpack.c.b16 %v870, %v868
    %v895 = vpack.c.b16 %v871, %v869
    %vm908 = vcmask 523264
    %v910 = vsel %vm908, %v873, 0
    %v913 = vsel %vm908, %v875, 0
    %v916 = vsel %vm908, %v877, 0
    %v919 = vsel %vm908, %v879, 0
    %v922 = vsel %vm908, %v881, 0
    %v925 = vsel %vm908, %v883, 0
    %v928 = vsel %vm908, %v885, 0
    %v931 = vsel %vm908, %v887, 0
    %v934 = vsel %vm908, %v889, 0
    %v937 = vsel %vm908, %v891, 0
    %v940 = vsel %vm908, %v893, 0
    %v943 = vsel %vm908, %v895, 0
    %945 = vmatpush.bf16.msra.mxu0 %v651
    %946 = vmatpush.bf16.msra.mxu0 %v650
    %947 = vmatpush.bf16.msra.mxu0 %v649
    %948 = vmatpush.bf16.msra.mxu0 %v648
    %949 = vmatpush.bf16.msra.mxu0 %v647
    %950 = vmatpush.bf16.msra.mxu0 %v646
    %951 = vmatpush.bf16.msra.mxu0 %v645
    %952 = vmatpush.bf16.msra.mxu0 %v644
    %953 = vmatmul.bf16.gmra.mxu0 %v872
    %v954 = vpop.f32.mrf.mxu0
    %v955 = vadd.f32 %v683, %v954
    %v956 = vpop.f32.mrf.mxu0
    %v957 = vadd.f32 %v688, %v956
    %958 = vmatmul.bf16.gmra.mxu0 %v874
    %v959 = vpop.f32.mrf.mxu0
    %v960 = vadd.f32 %v693, %v959
    %v961 = vpop.f32.mrf.mxu0
    %v962 = vadd.f32 %v698, %v961
    %963 = vmatmul.bf16.gmra.mxu0 %v876
    %v964 = vpop.f32.mrf.mxu0
    %v965 = vadd.f32 %v703, %v964
    %v966 = vpop.f32.mrf.mxu0
    %v967 = vadd.f32 %v708, %v966
    %968 = vmatmul.bf16.gmra.mxu0 %v878
    %v969 = vpop.f32.mrf.mxu0
    %v970 = vadd.f32 %v713, %v969
    %v971 = vpop.f32.mrf.mxu0
    %v972 = vadd.f32 %v718, %v971
    %973 = vmatmul.bf16.gmra.mxu0 %v880
    %v974 = vpop.f32.mrf.mxu0
    %v975 = vadd.f32 %v723, %v974
    %v976 = vpop.f32.mrf.mxu0
    %v977 = vadd.f32 %v728, %v976
    %978 = vmatmul.bf16.gmra.mxu0 %v882
    %v979 = vpop.f32.mrf.mxu0
    %v980 = vadd.f32 %v733, %v979
    %v981 = vpop.f32.mrf.mxu0
    %v982 = vadd.f32 %v738, %v981
    %983 = vmatmul.bf16.gmra.mxu0 %v884
    %v984 = vpop.f32.mrf.mxu0
    %v985 = vadd.f32 %v743, %v984
    %v986 = vpop.f32.mrf.mxu0
    %v987 = vadd.f32 %v748, %v986
    %988 = vmatmul.bf16.gmra.mxu0 %v886
    %v989 = vpop.f32.mrf.mxu0
    %v990 = vadd.f32 %v753, %v989
    %v991 = vpop.f32.mrf.mxu0
    %v992 = vadd.f32 %v758, %v991
    %993 = vmatmul.bf16.gmra.mxu0 %v888
    %v994 = vpop.f32.mrf.mxu0
    %v995 = vadd.f32 %v763, %v994
    %v996 = vpop.f32.mrf.mxu0
    %v997 = vadd.f32 %v768, %v996
    %998 = vmatmul.bf16.gmra.mxu0 %v890
    %v999 = vpop.f32.mrf.mxu0
    %v1000 = vadd.f32 %v773, %v999
    %v1001 = vpop.f32.mrf.mxu0
    %v1002 = vadd.f32 %v778, %v1001
    %1003 = vmatmul.bf16.gmra.mxu0 %v892
    %v1004 = vpop.f32.mrf.mxu0
    %v1005 = vadd.f32 %v783, %v1004
    %v1006 = vpop.f32.mrf.mxu0
    %v1007 = vadd.f32 %v788, %v1006
    %1008 = vmatmul.bf16.gmra.mxu0 %v894
    %v1009 = vpop.f32.mrf.mxu0
    %v1010 = vadd.f32 %v793, %v1009
    %v1011 = vpop.f32.mrf.mxu0
    %v1012 = vadd.f32 %v798, %v1011
    %1013 = vdwg.mxu0
    %1014 = vmatpush.bf16.msra.mxu0 0
    %1015 = vmatpush.bf16.msra.mxu0 0
    %1016 = vmatpush.bf16.msra.mxu0 0
    %1017 = vmatpush.bf16.msra.mxu0 0
    %1018 = vmatpush.bf16.msra.mxu0 %v655
    %1019 = vmatpush.bf16.msra.mxu0 %v654
    %1020 = vmatpush.bf16.msra.mxu0 %v653
    %1021 = vmatpush.bf16.msra.mxu0 %v652
    %1022 = vmatmul.bf16.gmra.mxu0 %v910
    %v1023 = vpop.f32.mrf.mxu0
    %v1024 = vadd.f32 %v955, %v1023
    %v1025 = vpop.f32.mrf.mxu0
    %v1026 = vadd.f32 %v957, %v1025
    %1027 = vmatmul.bf16.gmra.mxu0 %v913
    %v1028 = vpop.f32.mrf.mxu0
    %v1029 = vadd.f32 %v960, %v1028
    %v1030 = vpop.f32.mrf.mxu0
    %v1031 = vadd.f32 %v962, %v1030
    %1032 = vmatmul.bf16.gmra.mxu0 %v916
    %v1033 = vpop.f32.mrf.mxu0
    %v1034 = vadd.f32 %v965, %v1033
    %v1035 = vpop.f32.mrf.mxu0
    %v1036 = vadd.f32 %v967, %v1035
    %1037 = vmatmul.bf16.gmra.mxu0 %v919
    %v1038 = vpop.f32.mrf.mxu0
    %v1039 = vadd.f32 %v970, %v1038
    %v1040 = vpop.f32.mrf.mxu0
    %v1041 = vadd.f32 %v972, %v1040
    %1042 = vmatmul.bf16.gmra.mxu0 %v922
    %v1043 = vpop.f32.mrf.mxu0
    %v1044 = vadd.f32 %v975, %v1043
    %v1045 = vpop.f32.mrf.mxu0
    %v1046 = vadd.f32 %v977, %v1045
    %1047 = vmatmul.bf16.gmra.mxu0 %v925
    %v1048 = vpop.f32.mrf.mxu0
    %v1049 = vadd.f32 %v980, %v1048
    %v1050 = vpop.f32.mrf.mxu0
    %v1051 = vadd.f32 %v982, %v1050
    %1052 = vmatmul.bf16.gmra.mxu0 %v928
    %v1053 = vpop.f32.mrf.mxu0
    %v1054 = vadd.f32 %v985, %v1053
    %v1055 = vpop.f32.mrf.mxu0
    %v1056 = vadd.f32 %v987, %v1055
    %1057 = vmatmul.bf16.gmra.mxu0 %v931
    %v1058 = vpop.f32.mrf.mxu0
    %v1059 = vadd.f32 %v990, %v1058
    %v1060 = vpop.f32.mrf.mxu0
    %v1061 = vadd.f32 %v992, %v1060
    %1062 = vmatmul.bf16.gmra.mxu0 %v934
    %v1063 = vpop.f32.mrf.mxu0
    %v1064 = vadd.f32 %v995, %v1063
    %v1065 = vpop.f32.mrf.mxu0
    %v1066 = vadd.f32 %v997, %v1065
    %1067 = vmatmul.bf16.gmra.mxu0 %v937
    %v1068 = vpop.f32.mrf.mxu0
    %v1069 = vadd.f32 %v1000, %v1068
    %v1070 = vpop.f32.mrf.mxu0
    %v1071 = vadd.f32 %v1002, %v1070
    %1072 = vmatmul.bf16.gmra.mxu0 %v940
    %v1073 = vpop.f32.mrf.mxu0
    %v1074 = vadd.f32 %v1005, %v1073
    %v1075 = vpop.f32.mrf.mxu0
    %v1076 = vadd.f32 %v1007, %v1075
    %1077 = vmatmul.bf16.gmra.mxu0 %v943
    %v1078 = vpop.f32.mrf.mxu0
    %v1079 = vadd.f32 %v1010, %v1078
    %v1080 = vpop.f32.mrf.mxu0
    %v1081 = vadd.f32 %v1012, %v1080
    %1082 = vdwg.mxu0
    %v1083 = vmax.f32 %v1024, 0.0
    %v1084 = vmax.f32 %v1026, 0.0
    %v1085 = vmax.f32 %v1029, 0.0
    %v1086 = vmax.f32 %v1031, 0.0
    %v1087 = vmax.f32 %v1034, 0.0
    %v1088 = vmax.f32 %v1036, 0.0
    %v1089 = vmax.f32 %v1039, 0.0
    %v1090 = vmax.f32 %v1041, 0.0
    %v1091 = vmax.f32 %v1044, 0.0
    %v1092 = vmax.f32 %v1046, 0.0
    %v1093 = vmax.f32 %v1049, 0.0
    %v1094 = vmax.f32 %v1051, 0.0
    %v1095 = vmax.f32 %v1054, 0.0
    %v1096 = vmax.f32 %v1056, 0.0
    %v1097 = vmax.f32 %v1059, 0.0
    %v1098 = vmax.f32 %v1061, 0.0
    %v1099 = vmax.f32 %v1064, 0.0
    %v1100 = vmax.f32 %v1066, 0.0
    %v1101 = vmax.f32 %v1069, 0.0
    %v1102 = vmax.f32 %v1071, 0.0
    %v1103 = vmax.f32 %v1074, 0.0
    %v1104 = vmax.f32 %v1076, 0.0
    %v1105 = vmax.f32 %v1079, 0.0
    %v1106 = vmax.f32 %v1081, 0.0
    %v1107 = vld [vmem:[%s9] sm:$0xff]
    %v1108 = vpack.c.bf16 %v1084, %v1083
    %v1109 = vpack.c.bf16 %v1086, %v1085
    %v1110 = vpack.c.bf16 %v1088, %v1087
    %v1111 = vpack.c.bf16 %v1090, %v1089
    %v1112 = vpack.c.bf16 %v1092, %v1091
    %v1113 = vpack.c.bf16 %v1094, %v1093
    %v1114 = vpack.c.bf16 %v1096, %v1095
    %v1115 = vpack.c.bf16 %v1098, %v1097
    %v1116 = vpack.c.bf16 %v1100, %v1099
    %v1117 = vpack.c.bf16 %v1102, %v1101
    %v1118 = vpack.c.bf16 %v1104, %v1103
    %v1119 = vpack.c.bf16 %v1106, %v1105
    %v1120 = vld [vmem:[%s10] sm:$0xff]
    %1122 = vset.pattern.permute.xlu0 0
    %1123 = vperm.xlu0 %1122, %v1120
    %v1124 = vpop.permute.xlu0 %1123
    %v1127 = vunpack.c.l.b16 %v1107
    %v1128 = vunpack.c.h.b16 %v1107
    %v1129 = vpack.c.b16 %v1127, %v1127
    %v1130 = vpack.c.b16 %v1128, %v1128
    %v1133 = vsel %vm908, %v1130, 0
    %1135 = vmatpush.bf16.msra.mxu0 %v1115
    %1136 = vmatpush.bf16.msra.mxu0 %v1114
    %1137 = vmatpush.bf16.msra.mxu0 %v1113
    %1138 = vmatpush.bf16.msra.mxu0 %v1112
    %1139 = vmatpush.bf16.msra.mxu0 %v1111
    %1140 = vmatpush.bf16.msra.mxu0 %v1110
    %1141 = vmatpush.bf16.msra.mxu0 %v1109
    %1142 = vmatpush.bf16.msra.mxu0 %v1108
    %1143 = vmatmul.bf16.gmra.mxu0 %v1129
    %v1144 = vpop.f32.mrf.mxu0
    %v1145 = vadd.f32 %v1124, %v1144
    %v1146 = vpop.f32.mrf.mxu0
    %1147 = vdwg.mxu0
    %1148 = vmatpush.bf16.msra.mxu0 0
    %1149 = vmatpush.bf16.msra.mxu0 0
    %1150 = vmatpush.bf16.msra.mxu0 0
    %1151 = vmatpush.bf16.msra.mxu0 0
    %1152 = vmatpush.bf16.msra.mxu0 %v1119
    %1153 = vmatpush.bf16.msra.mxu0 %v1118
    %1154 = vmatpush.bf16.msra.mxu0 %v1117
    %1155 = vmatpush.bf16.msra.mxu0 %v1116
    %1156 = vmatmul.bf16.gmra.mxu0 %v1133
    %v1157 = vpop.f32.mrf.mxu0
    %v1158 = vadd.f32 %v1145, %v1157
    %v1159 = vpop.f32.mrf.mxu0
    %1160 = vdwg.mxu0
    %v1161 = vld [vmem:[%s2] sm:$0x1]
    %v1162 = vsub.f32 1.0, %v1161
    %v1163 = vmul.f32 %v1162, 0.99
    %1165 = vst [vmem:[#allocation1] sm:$0xff] %v1158
    %s1166 = scalar_lea.vmem [#allocation1], 1
    %v1167 = vld [vmem:[%s1166] ss:$9 sm:$0xff]
    %v1169 = vmul.f32 %v1163, %v1167
    %v1170 = vadd.f32 %v1158, %v1169
    %v1171 = vld [vmem:[%s3] sm:$0x1]
    %v1172 = vsub.f32 %v1171, %v1170
    %v1173 = vmul.f32 %v1172, 1.442695
    %v1174 = vpow.pop %v1173
    %v1175 = vadd.f32 %v1174, 1.0
    %v1176 = vrcp.pop %v1175
    %v1177 = vmul.f32 %v1175, %v1176
    %v1178 = vsub.f32 1.0, %v1177
    %v1179 = vmul.f32 %v1176, %v1178
    %v1180 = vadd.f32 %v1176, %v1179
    %vm1181 = vweird.f32 %v1175
    %vm1182 = vweird.f32 %v1176
    %vm1183 = vmor %vm1181, %vm1182
    %v1184 = vsel %vm1183, %v1176, %v1180
    %v1185 = vand.u32 2147483647, %v1175
    %vm1186 = vcmp.eq.f32.partialorder %v1185, 8.507059e+37
    %v1187 = vand.u32 %v1175, 2147483648
    %v1188 = vor.u32 1.1754944e-38, %v1187
    %v1189 = vsel %vm1186, %v1188, %v1184
    %v1190 = vmul.f32 1.0, %v1189
    %1191 = vst [vmem:[#allocation2] sm:$0x1] %v1190
    // Predicated region
    $region46: #{tpu_custom_call.1} parent=1 // pred_check
      _
    $region47: #{tpu_custom_call.1} parent=1 // pred_check_branch
      %1193 = sbr.rel (0) target = $region49
    $region48: #{tpu_custom_call.1} parent=1 // pred_region
      %1195 = vsyncadd [#allocation3], 0
      %s1197 = sshll.u32 [#allocation2], 4
      %s1198 = int_to_ptr.vmem [resolvable:$true] %s1197
      %s1199 = sshll.u32 %s11, 4
      %s1200 = int_to_ptr.hbm [resolvable:$true] %s1199
      %1202 = dma.vmem_to_hbm [thread:$0]  %s1198, 16, %s1200, [#allocation3]
    $region49: #{tpu_custom_call.1} parent=1 // pred_fallthru
      _
    // Predicated region
    $region50: #{tpu_custom_call.1} parent=1 // pred_check
      _
    $region51: #{tpu_custom_call.1} parent=1 // pred_check_branch
      %1204 = sbr.rel (0) target = $region53
    $region52: #{tpu_custom_call.1} parent=1 // pred_region
      %1206 = dma.done [#allocation3], 16
    $region53: #{tpu_custom_call.1} parent=1 // pred_fallthru
      _
    %1207 = vsyncpa [#allocation3], 1

</llo_original>
